<compile_context>
chip_gen: v6e
topology: v6e:2x2x1
jax: 0.10.0
libtpu: 0.0.40
codegen_flags: <defaults>
</compile_context>

<pallas_src>
import jax
import jax.numpy as jnp
from jax.experimental import pallas as pl
from jax.experimental.pallas import tpu as pltpu


def critic_kernel(x_ref, a_ref,
                  w1_ref, b1_ref,
                  w2x_ref, w2a_ref, b2_ref,
                  w3_ref, b3_ref,
                  w4t_ref, b4_ref,
                  out_ref):
    x = x_ref[...]
    a = a_ref[...]

    # fc1 + relu
    h1 = jnp.maximum(
        jnp.dot(x, w1_ref[...], preferred_element_type=jnp.float32) + b1_ref[...],
        0.0)
    # fc2(relu(cat([h1, a], 1))): cat([h1, a]) @ W2 == h1 @ W2[:H1] + a @ W2[H1:]
    h2 = jnp.maximum(
        jnp.dot(h1, w2x_ref[...], preferred_element_type=jnp.float32)
        + jnp.dot(a, w2a_ref[...], preferred_element_type=jnp.float32)
        + b2_ref[...],
        0.0)
    # fc3 + relu
    h3 = jnp.maximum(
        jnp.dot(h2, w3_ref[...], preferred_element_type=jnp.float32) + b3_ref[...],
        0.0)
    # fc4: single output lane -> VPU multiply + cross-lane reduce (XLU) instead of
    # a 1-lane-wide MXU matmul with a masked result pop.
    q = jnp.sum(h3 * w4t_ref[...], axis=-1, keepdims=True) + b4_ref[...]

    # The PyTorch module runs the identical pipeline twice; the results are
    # bit-identical, so compute once and let the wrapper return it twice.
    out_ref[...] = q


def _round_up(n, m):
    return ((n + m - 1) // m) * m


def critic_forward(x, a, params, *, block_b=None):
    """x: (B, state_num) f32; a: (1, B, action_num) f32 (squeezed inside, like PyTorch)."""
    a = jnp.squeeze(a, axis=0)
    B, S = x.shape
    _, A = a.shape
    (w1, b1), (w2x, w2a, b2), (w3, b3), (w4t, b4) = params

    # Batch tile: multiple of 8 sublanes, capped near 512 rows so realistic
    # batch sizes give many pipelined / megacore-parallel grid steps while the
    # (tiny) weights stay resident in VMEM via constant index_maps.
    tb = block_b or min(512, _round_up(B, 8))
    tb = _round_up(tb, 8)
    Bp = _round_up(B, tb)
    if Bp != B:
        pad = Bp - B
        x = jnp.pad(x, ((0, pad), (0, 0)))
        a = jnp.pad(a, ((0, pad), (0, 0)))
    grid = (Bp // tb,)

    def batched(feat):
        return pl.BlockSpec((tb, feat), lambda i: (i, 0))

    def whole(arr):
        return pl.BlockSpec(arr.shape, lambda i: (0,) * arr.ndim)

    out = pl.pallas_call(
        critic_kernel,
        out_shape=jax.ShapeDtypeStruct((Bp, 1), jnp.float32),
        grid_spec=pltpu.PrefetchScalarGridSpec(
            num_scalar_prefetch=0,
            grid=grid,
            in_specs=[
                batched(S),          # x
                batched(A),          # a
                whole(w1), whole(b1),
                whole(w2x), whole(w2a), whole(b2),
                whole(w3), whole(b3),
                whole(w4t), whole(b4),
            ],
            out_specs=pl.BlockSpec((tb, 1), lambda i: (i, 0)),
        ),
        compiler_params=pltpu.CompilerParams(
            dimension_semantics=("parallel",)),
    )(x, a, w1, b1, w2x, w2a, b2, w3, b3, w4t, b4)

    out = out[:B]
    # out_1 and out_2 of the PyTorch module are identical; duplication is free.
    return out, out


def init_linear(key, fan_in, fan_out):
    """Deterministic init matching nn.Linear's default uniform(-1/sqrt(in), 1/sqrt(in))."""
    kw, kb = jax.random.split(key)
    bound = 1.0 / jnp.sqrt(jnp.float32(fan_in))
    w = jax.random.uniform(kw, (fan_in, fan_out), jnp.float32, -bound, bound)
    b = jax.random.uniform(kb, (1, fan_out), jnp.float32, -bound, bound)
    return w, b


def make_params(key, state_num, action_num, hidden1, hidden2, hidden3):
    k1, k2, k3, k4 = jax.random.split(key, 4)
    w1, b1 = init_linear(k1, state_num, hidden1)
    w2, b2 = init_linear(k2, hidden1 + action_num, hidden2)
    w3, b3 = init_linear(k3, hidden2, hidden3)
    w4, b4 = init_linear(k4, hidden3, 1)
    # Pre-split W2 (for the concat-as-two-matmuls decomposition) and
    # pre-transpose W4 so the per-call hot path never slices/transposes weights.
    return ((w1, b1),
            (w2[:hidden1], w2[hidden1:], b2),
            (w3, b3),
            (w4.T, b4))


def reference_forward(x, a, params):
    a = jnp.squeeze(a, axis=0)
    (w1, b1), (w2x, w2a, b2), (w3, b3), (w4t, b4) = params
    w2 = jnp.concatenate([w2x, w2a], axis=0)
    h = jnp.maximum(x @ w1 + b1, 0.0)
    h = jnp.maximum(jnp.concatenate([h, a], axis=1) @ w2 + b2, 0.0)
    h = jnp.maximum(h @ w3 + b3, 0.0)
    out = h @ w4t.T + b4
    return out, out


if __name__ == "__main__":
    # Small shapes consistent with the module's forward.
    B, STATE, ACTION = 8, 16, 8
    H1 = H2 = H3 = 32

    key = jax.random.PRNGKey(0)
    kx, ka, kp = jax.random.split(key, 3)

    x = jax.random.normal(kx, (B, STATE), jnp.float32)
    a = jax.random.normal(ka, (1, B, ACTION), jnp.float32)  # squeezed(0) inside, like PyTorch
    params = make_params(kp, STATE, ACTION, H1, H2, H3)

    out1, out2 = critic_forward(x, a, params)
    out1, out2 = jax.block_until_ready((out1, out2))

    ref1, ref2 = reference_forward(x, a, params)
    assert out1.shape == (B, 1) and out2.shape == (B, 1)
    assert jnp.allclose(out1, ref1, atol=1e-5, rtol=1e-5)
    assert jnp.allclose(out2, ref2, atol=1e-5, rtol=1e-5)

    print("KERNEL_OK")
</pallas_src>

<mosaic_0001>
module attributes {stable_mosaic.version = 11 : i64} {
  func.func @critic_kernel(%arg0: i32, %arg1: memref<8x16xf32, #tpu.memory_space<vmem>>, %arg2: memref<8x8xf32, #tpu.memory_space<vmem>>, %arg3: memref<16x32xf32, #tpu.memory_space<vmem>>, %arg4: memref<1x32xf32, #tpu.memory_space<vmem>>, %arg5: memref<32x32xf32, #tpu.memory_space<vmem>>, %arg6: memref<8x32xf32, #tpu.memory_space<vmem>>, %arg7: memref<1x32xf32, #tpu.memory_space<vmem>>, %arg8: memref<32x32xf32, #tpu.memory_space<vmem>>, %arg9: memref<1x32xf32, #tpu.memory_space<vmem>>, %arg10: memref<1x32xf32, #tpu.memory_space<vmem>>, %arg11: memref<1x1xf32, #tpu.memory_space<vmem>>, %arg12: memref<8x1xf32, #tpu.memory_space<vmem>>) attributes {dimension_semantics = [#tpu.dimension_semantics<parallel>], iteration_bounds = array<i64: 1>, scalar_prefetch = 0 : i64, scratch_operands = 0 : i64, tpu.core_type = #tpu.core_type<tc>, window_params = [{transform_indices = @transform_0, window_bounds = array<i64: 8, 16>}, {transform_indices = @transform_1, window_bounds = array<i64: 8, 8>}, {pipeline_mode = #tpu.pipeline_mode<synchronous>, transform_indices = @transform_2, window_bounds = array<i64: 16, 32>}, {pipeline_mode = #tpu.pipeline_mode<synchronous>, transform_indices = @transform_3, window_bounds = array<i64: 1, 32>}, {pipeline_mode = #tpu.pipeline_mode<synchronous>, transform_indices = @transform_4, window_bounds = array<i64: 32, 32>}, {pipeline_mode = #tpu.pipeline_mode<synchronous>, transform_indices = @transform_5, window_bounds = array<i64: 8, 32>}, {pipeline_mode = #tpu.pipeline_mode<synchronous>, transform_indices = @transform_6, window_bounds = array<i64: 1, 32>}, {pipeline_mode = #tpu.pipeline_mode<synchronous>, transform_indices = @transform_7, window_bounds = array<i64: 32, 32>}, {pipeline_mode = #tpu.pipeline_mode<synchronous>, transform_indices = @transform_8, window_bounds = array<i64: 1, 32>}, {pipeline_mode = #tpu.pipeline_mode<synchronous>, transform_indices = @transform_9, window_bounds = array<i64: 1, 32>}, {pipeline_mode = #tpu.pipeline_mode<synchronous>, transform_indices = @transform_10, window_bounds = array<i64: 1, 1>}, {transform_indices = @transform_11, window_bounds = array<i64: 8, 1>}]} {
    %c0 = arith.constant 0 : index
    %c0_0 = arith.constant 0 : index
    %0 = vector.load %arg1[%c0, %c0_0] : memref<8x16xf32, #tpu.memory_space<vmem>>, vector<8x16xf32>
    %c0_1 = arith.constant 0 : index
    %c0_2 = arith.constant 0 : index
    %1 = vector.load %arg2[%c0_1, %c0_2] : memref<8x8xf32, #tpu.memory_space<vmem>>, vector<8x8xf32>
    %c0_3 = arith.constant 0 : index
    %c0_4 = arith.constant 0 : index
    %2 = vector.load %arg3[%c0_3, %c0_4] : memref<16x32xf32, #tpu.memory_space<vmem>>, vector<16x32xf32>
    %cst = arith.constant dense<0.000000e+00> : vector<8x32xf32>
    %3 = tpu.matmul %0, %2, %cst {dimension_numbers = #tpu.dot_dimension_numbers<[1], [0], [0], [1], [0, 0, 1, 1], [], []>} : vector<8x16xf32>, vector<16x32xf32>, vector<8x32xf32> -> vector<8x32xf32>
    %c0_5 = arith.constant 0 : index
    %c0_6 = arith.constant 0 : index
    %4 = vector.load %arg4[%c0_5, %c0_6] : memref<1x32xf32, #tpu.memory_space<vmem>>, vector<1x32xf32>
    %5 = vector.broadcast %4 : vector<1x32xf32> to vector<8x32xf32>
    %6 = arith.addf %3, %5 : vector<8x32xf32>
    %cst_7 = arith.constant 0.000000e+00 : f32
    %7 = vector.broadcast %cst_7 : f32 to vector<8x32xf32>
    %8 = arith.maximumf %6, %7 : vector<8x32xf32>
    %c0_8 = arith.constant 0 : index
    %c0_9 = arith.constant 0 : index
    %9 = vector.load %arg5[%c0_8, %c0_9] : memref<32x32xf32, #tpu.memory_space<vmem>>, vector<32x32xf32>
    %cst_10 = arith.constant dense<0.000000e+00> : vector<8x32xf32>
    %10 = tpu.matmul %8, %9, %cst_10 {dimension_numbers = #tpu.dot_dimension_numbers<[1], [0], [0], [1], [0, 0, 1, 1], [], []>} : vector<8x32xf32>, vector<32x32xf32>, vector<8x32xf32> -> vector<8x32xf32>
    %c0_11 = arith.constant 0 : index
    %c0_12 = arith.constant 0 : index
    %11 = vector.load %arg6[%c0_11, %c0_12] : memref<8x32xf32, #tpu.memory_space<vmem>>, vector<8x32xf32>
    %cst_13 = arith.constant dense<0.000000e+00> : vector<8x32xf32>
    %12 = tpu.matmul %1, %11, %cst_13 {dimension_numbers = #tpu.dot_dimension_numbers<[1], [0], [0], [1], [0, 0, 1, 1], [], []>} : vector<8x8xf32>, vector<8x32xf32>, vector<8x32xf32> -> vector<8x32xf32>
    %13 = arith.addf %10, %12 : vector<8x32xf32>
    %c0_14 = arith.constant 0 : index
    %c0_15 = arith.constant 0 : index
    %14 = vector.load %arg7[%c0_14, %c0_15] : memref<1x32xf32, #tpu.memory_space<vmem>>, vector<1x32xf32>
    %15 = vector.broadcast %14 : vector<1x32xf32> to vector<8x32xf32>
    %16 = arith.addf %13, %15 : vector<8x32xf32>
    %cst_16 = arith.constant 0.000000e+00 : f32
    %17 = vector.broadcast %cst_16 : f32 to vector<8x32xf32>
    %18 = arith.maximumf %16, %17 : vector<8x32xf32>
    %c0_17 = arith.constant 0 : index
    %c0_18 = arith.constant 0 : index
    %19 = vector.load %arg8[%c0_17, %c0_18] : memref<32x32xf32, #tpu.memory_space<vmem>>, vector<32x32xf32>
    %cst_19 = arith.constant dense<0.000000e+00> : vector<8x32xf32>
    %20 = tpu.matmul %18, %19, %cst_19 {dimension_numbers = #tpu.dot_dimension_numbers<[1], [0], [0], [1], [0, 0, 1, 1], [], []>} : vector<8x32xf32>, vector<32x32xf32>, vector<8x32xf32> -> vector<8x32xf32>
    %c0_20 = arith.constant 0 : index
    %c0_21 = arith.constant 0 : index
    %21 = vector.load %arg9[%c0_20, %c0_21] : memref<1x32xf32, #tpu.memory_space<vmem>>, vector<1x32xf32>
    %22 = vector.broadcast %21 : vector<1x32xf32> to vector<8x32xf32>
    %23 = arith.addf %20, %22 : vector<8x32xf32>
    %cst_22 = arith.constant 0.000000e+00 : f32
    %24 = vector.broadcast %cst_22 : f32 to vector<8x32xf32>
    %25 = arith.maximumf %23, %24 : vector<8x32xf32>
    %c0_23 = arith.constant 0 : index
    %c0_24 = arith.constant 0 : index
    %26 = vector.load %arg10[%c0_23, %c0_24] : memref<1x32xf32, #tpu.memory_space<vmem>>, vector<1x32xf32>
    %27 = vector.broadcast %26 : vector<1x32xf32> to vector<8x32xf32>
    %28 = arith.mulf %25, %27 : vector<8x32xf32>
    %cst_25 = arith.constant dense<0.000000e+00> : vector<8xf32>
    %29 = vector.multi_reduction <add>, %28, %cst_25 [1] : vector<8x32xf32> to vector<8xf32>
    %30 = vector.shape_cast %29 : vector<8xf32> to vector<8x1xf32>
    %c0_26 = arith.constant 0 : index
    %c0_27 = arith.constant 0 : index
    %31 = vector.load %arg11[%c0_26, %c0_27] : memref<1x1xf32, #tpu.memory_space<vmem>>, vector<1x1xf32>
    %32 = vector.broadcast %31 : vector<1x1xf32> to vector<8x1xf32>
    %33 = arith.addf %30, %32 : vector<8x1xf32>
    %c0_28 = arith.constant 0 : index
    %c0_29 = arith.constant 0 : index
    %34 = vector.load %arg12[%c0_28, %c0_29] : memref<8x1xf32, #tpu.memory_space<vmem>>, vector<8x1xf32>
    tpu.vector_store %arg12[%c0_28, %c0_29], %33 {strides = array<i32>} : memref<8x1xf32, #tpu.memory_space<vmem>>, vector<8x1xf32>,
    return
  }
  func.func @transform_0(%arg0: i32) -> (i32, i32) {
    %c0_i32 = arith.constant 0 : i32
    %c0_i32_0 = arith.constant 0 : i32
    return %arg0, %c0_i32 : i32, i32
  }
  func.func @transform_1(%arg0: i32) -> (i32, i32) {
    %c0_i32 = arith.constant 0 : i32
    %c0_i32_0 = arith.constant 0 : i32
    return %arg0, %c0_i32 : i32, i32
  }
  func.func @transform_2(%arg0: i32) -> (i32, i32) {
    %c0_i32 = arith.constant 0 : i32
    %c0_i32_0 = arith.constant 0 : i32
    %c0_i32_1 = arith.constant 0 : i32
    return %c0_i32, %c0_i32_0 : i32, i32
  }
  func.func @transform_3(%arg0: i32) -> (i32, i32) {
    %c0_i32 = arith.constant 0 : i32
    %c0_i32_0 = arith.constant 0 : i32
    %c0_i32_1 = arith.constant 0 : i32
    return %c0_i32, %c0_i32_0 : i32, i32
  }
  func.func @transform_4(%arg0: i32) -> (i32, i32) {
    %c0_i32 = arith.constant 0 : i32
    %c0_i32_0 = arith.constant 0 : i32
    %c0_i32_1 = arith.constant 0 : i32
    return %c0_i32, %c0_i32_0 : i32, i32
  }
  func.func @transform_5(%arg0: i32) -> (i32, i32) {
    %c0_i32 = arith.constant 0 : i32
    %c0_i32_0 = arith.constant 0 : i32
    %c0_i32_1 = arith.constant 0 : i32
    return %c0_i32, %c0_i32_0 : i32, i32
  }
  func.func @transform_6(%arg0: i32) -> (i32, i32) {
    %c0_i32 = arith.constant 0 : i32
    %c0_i32_0 = arith.constant 0 : i32
    %c0_i32_1 = arith.constant 0 : i32
    return %c0_i32, %c0_i32_0 : i32, i32
  }
  func.func @transform_7(%arg0: i32) -> (i32, i32) {
    %c0_i32 = arith.constant 0 : i32
    %c0_i32_0 = arith.constant 0 : i32
    %c0_i32_1 = arith.constant 0 : i32
    return %c0_i32, %c0_i32_0 : i32, i32
  }
  func.func @transform_8(%arg0: i32) -> (i32, i32) {
    %c0_i32 = arith.constant 0 : i32
    %c0_i32_0 = arith.constant 0 : i32
    %c0_i32_1 = arith.constant 0 : i32
    return %c0_i32, %c0_i32_0 : i32, i32
  }
  func.func @transform_9(%arg0: i32) -> (i32, i32) {
    %c0_i32 = arith.constant 0 : i32
    %c0_i32_0 = arith.constant 0 : i32
    %c0_i32_1 = arith.constant 0 : i32
    return %c0_i32, %c0_i32_0 : i32, i32
  }
  func.func @transform_10(%arg0: i32) -> (i32, i32) {
    %c0_i32 = arith.constant 0 : i32
    %c0_i32_0 = arith.constant 0 : i32
    %c0_i32_1 = arith.constant 0 : i32
    return %c0_i32, %c0_i32_0 : i32, i32
  }
  func.func @transform_11(%arg0: i32) -> (i32, i32) {
    %c0_i32 = arith.constant 0 : i32
    %c0_i32_0 = arith.constant 0 : i32
    return %arg0, %c0_i32 : i32, i32
  }
}

</mosaic_0001>

<llo_original>
// kernel: tpu_custom_call.1
$region0: #{tpu_custom_call.1}
  #allocation0 [shape = 'u32[]', space=smem, size = 0x4, offset = 0x4, fixed_abs, tag = 'smem constant byte address 0x4 - core index']
  #allocation1 [shape = 'u32[144,128]{1,0:T(1,128)}', space=vmem, size = 0x12000, scoped, tag = 'internal scratch']
  #allocation2 [shape = 'f32[1,1]{1,0:T(1,128)S(1)}', space=vmem, size = 0x200, scoped, tag = 'scoped memory for tpu_custom_call.1']
  %s0 = inlined_call_operand.hbm [shape: f32[8,16], index: 0, kind: input, shape index: {}]
  %s1 = inlined_call_operand.hbm [shape: f32[8,8], index: 1, kind: input, shape index: {}]
  %s2 = inlined_call_operand.hbm [shape: f32[16,32], index: 2, kind: input, shape index: {}]
  %s3 = inlined_call_operand.vmem [shape: f32[1,32], index: 3, kind: input, shape index: {}]
  %s4 = inlined_call_operand.hbm [shape: f32[32,32], index: 4, kind: input, shape index: {}]
  %s5 = inlined_call_operand.vmem [shape: f32[8,32], index: 5, kind: input, shape index: {}]
  %s6 = inlined_call_operand.vmem [shape: f32[1,32], index: 6, kind: input, shape index: {}]
  %s7 = inlined_call_operand.hbm [shape: f32[32,32], index: 7, kind: input, shape index: {}]
  %s8 = inlined_call_operand.vmem [shape: f32[1,32], index: 8, kind: input, shape index: {}]
  %s9 = inlined_call_operand.vmem [shape: f32[1,32], index: 9, kind: input, shape index: {}]
  %s10 = inlined_call_operand.<no memory space> [shape: f32[1,1], index: 10, kind: input, shape index: {}]
  %s11 = inlined_call_operand.vmem [shape: f32[8,1], index: 11, kind: output, shape index: {}]
  %s12 = sld [smem:[#allocation0]]
  $region74: #{tpu_custom_call.1} parent=0
    _
  %s14 = ssub.s32 1, %s12
  %s15 = scalar_select 0, %s14, %s12
  %v16 = vstv %s10
  %17 = vst [vmem:[#allocation2] sm:$0x1] %v16
  $region1: #{tpu_custom_call.1} parent=0
    #allocation3 [shape = 'u8[4096]{0}', space=vmem, size = 0x1000, scoped, tag = 'input window, operand 0, single buffered']
    #allocation4 [shape = 's32[1]{0}', space=sflag, size = 0x4, scoped, tag = 'scoped memory for tpu_custom_call.1']
    #allocation5 [shape = 'u8[4096]{0}', space=vmem, size = 0x1000, scoped, tag = 'input window, operand 1, single buffered']
    #allocation6 [shape = 's32[1]{0}', space=sflag, size = 0x4, scoped, tag = 'scoped memory for tpu_custom_call.1']
    #allocation7 [shape = 'u8[8192]{0}', space=vmem, size = 0x2000, scoped, tag = 'input window, operand 2, single buffered']
    #allocation8 [shape = 'u8[16384]{0}', space=vmem, size = 0x4000, scoped, tag = 'input window, operand 4, single buffered']
    #allocation9 [shape = 's32[1]{0}', space=sflag, size = 0x4, scoped, tag = 'scoped memory for tpu_custom_call.1']
    #allocation10 [shape = 'u8[16384]{0}', space=vmem, size = 0x4000, scoped, tag = 'input window, operand 7, single buffered']
    %18 = vsyncpa [#allocation4], 0
    %19 = vsyncpa [#allocation6], 0
    %20 = vsyncpa [#allocation9], 0
    // Predicated region
    $region2: #{tpu_custom_call.1} parent=1 // pred_check
      _
    $region3: #{tpu_custom_call.1} parent=1 // pred_check_branch
      %22 = sbr.rel (0) target = $region5
    $region4: #{tpu_custom_call.1} parent=1 // pred_region
      %s24 = ssub.s32 128, 128
      %25 = vsyncadd [#allocation4], %s24
      %s27 = sshll.u32 [#allocation3], 4
      %s28 = int_to_ptr.vmem [resolvable:$true] %s27
      %30 = dma.hbm_to_vmem [thread:$0]  %s0, 128, %s28, [#allocation4]
    $region5: #{tpu_custom_call.1} parent=1 // pred_fallthru
      _
    // Predicated region
    $region6: #{tpu_custom_call.1} parent=1 // pred_check
      _
    $region7: #{tpu_custom_call.1} parent=1 // pred_check_branch
      %32 = sbr.rel (0) target = $region9
    $region8: #{tpu_custom_call.1} parent=1 // pred_region
      %s34 = ssub.s32 128, 128
      %35 = vsyncadd [#allocation6], %s34
      %s37 = sshll.u32 [#allocation5], 4
      %s38 = int_to_ptr.vmem [resolvable:$true] %s37
      %40 = dma.hbm_to_vmem [thread:$0]  %s1, 128, %s38, [#allocation6]
    $region9: #{tpu_custom_call.1} parent=1 // pred_fallthru
      _
    // Predicated region
    $region10: #{tpu_custom_call.1} parent=1 // pred_check
      _
    $region11: #{tpu_custom_call.1} parent=1 // pred_check_branch
      %42 = sbr.rel (0) target = $region13
    $region12: #{tpu_custom_call.1} parent=1 // pred_region
      %s44 = ssub.s32 256, 256
      %45 = vsyncadd [#allocation6], %s44
      %s46 = sshll.u32 [#allocation7], 4
      %s47 = int_to_ptr.vmem [resolvable:$true] %s46
      %52 = dma.hbm_to_vmem [thread:$0]  %s2, 256, %s47, [#allocation6], 128, 128, 8
    $region13: #{tpu_custom_call.1} parent=1 // pred_fallthru
      _
    // Predicated region
    $region14: #{tpu_custom_call.1} parent=1 // pred_check
      _
    $region15: #{tpu_custom_call.1} parent=1 // pred_check_branch
      %54 = sbr.rel (0) target = $region17
    $region16: #{tpu_custom_call.1} parent=1 // pred_region
      _
    $region17: #{tpu_custom_call.1} parent=1 // pred_fallthru
      _
    // Predicated region
    $region18: #{tpu_custom_call.1} parent=1 // pred_check
      _
    $region19: #{tpu_custom_call.1} parent=1 // pred_check_branch
      %56 = sbr.rel (0) target = $region21
    $region20: #{tpu_custom_call.1} parent=1 // pred_region
      %s58 = ssub.s32 512, 512
      %59 = vsyncadd [#allocation9], %s58
      %s60 = sshll.u32 [#allocation8], 4
      %s61 = int_to_ptr.vmem [resolvable:$true] %s60
      %66 = dma.hbm_to_vmem [thread:$0]  %s4, 512, %s61, [#allocation9], 128, 128, 8
    $region21: #{tpu_custom_call.1} parent=1 // pred_fallthru
      _
    // Predicated region
    $region22: #{tpu_custom_call.1} parent=1 // pred_check
      _
    $region23: #{tpu_custom_call.1} parent=1 // pred_check_branch
      %68 = sbr.rel (0) target = $region25
    $region24: #{tpu_custom_call.1} parent=1 // pred_region
      _
    $region25: #{tpu_custom_call.1} parent=1 // pred_fallthru
      _
    // Predicated region
    $region26: #{tpu_custom_call.1} parent=1 // pred_check
      _
    $region27: #{tpu_custom_call.1} parent=1 // pred_check_branch
      %70 = sbr.rel (0) target = $region29
    $region28: #{tpu_custom_call.1} parent=1 // pred_region
      _
    $region29: #{tpu_custom_call.1} parent=1 // pred_fallthru
      _
    // Predicated region
    $region30: #{tpu_custom_call.1} parent=1 // pred_check
      _
    $region31: #{tpu_custom_call.1} parent=1 // pred_check_branch
      %72 = sbr.rel (0) target = $region33
    $region32: #{tpu_custom_call.1} parent=1 // pred_region
      %s74 = ssub.s32 512, 512
      %75 = vsyncadd [#allocation9], %s74
      %s76 = sshll.u32 [#allocation10], 4
      %s77 = int_to_ptr.vmem [resolvable:$true] %s76
      %82 = dma.hbm_to_vmem [thread:$0]  %s7, 512, %s77, [#allocation9], 128, 128, 8
    $region33: #{tpu_custom_call.1} parent=1 // pred_fallthru
      _
    // Predicated region
    $region34: #{tpu_custom_call.1} parent=1 // pred_check
      _
    $region35: #{tpu_custom_call.1} parent=1 // pred_check_branch
      %84 = sbr.rel (0) target = $region37
    $region36: #{tpu_custom_call.1} parent=1 // pred_region
      _
    $region37: #{tpu_custom_call.1} parent=1 // pred_fallthru
      _
    // Predicated region
    $region38: #{tpu_custom_call.1} parent=1 // pred_check
      _
    $region39: #{tpu_custom_call.1} parent=1 // pred_check_branch
      %86 = sbr.rel (0) target = $region41
    $region40: #{tpu_custom_call.1} parent=1 // pred_region
      _
    $region41: #{tpu_custom_call.1} parent=1 // pred_fallthru
      _
    // Predicated region
    $region42: #{tpu_custom_call.1} parent=1 // pred_check
      _
    $region43: #{tpu_custom_call.1} parent=1 // pred_check_branch
      %88 = sbr.rel (0) target = $region45
    $region44: #{tpu_custom_call.1} parent=1 // pred_region
      _
    $region45: #{tpu_custom_call.1} parent=1 // pred_fallthru
      _
    // Predicated region
    $region46: #{tpu_custom_call.1} parent=1 // pred_check
      _
    $region47: #{tpu_custom_call.1} parent=1 // pred_check_branch
      %90 = sbr.rel (0) target = $region49
    $region48: #{tpu_custom_call.1} parent=1 // pred_region
      %91 = dma.done [#allocation4], 128
    $region49: #{tpu_custom_call.1} parent=1 // pred_fallthru
      _
    // Predicated region
    $region50: #{tpu_custom_call.1} parent=1 // pred_check
      _
    $region51: #{tpu_custom_call.1} parent=1 // pred_check_branch
      %93 = sbr.rel (0) target = $region53
    $region52: #{tpu_custom_call.1} parent=1 // pred_region
      %94 = dma.done [#allocation6], 128
    $region53: #{tpu_custom_call.1} parent=1 // pred_fallthru
      _
    // Predicated region
    $region54: #{tpu_custom_call.1} parent=1 // pred_check
      _
    $region55: #{tpu_custom_call.1} parent=1 // pred_check_branch
      %96 = sbr.rel (0) target = $region57
    $region56: #{tpu_custom_call.1} parent=1 // pred_region
      %97 = dma.done [#allocation6], 256
    $region57: #{tpu_custom_call.1} parent=1 // pred_fallthru
      _
    // Predicated region
    $region58: #{tpu_custom_call.1} parent=1 // pred_check
      _
    $region59: #{tpu_custom_call.1} parent=1 // pred_check_branch
      %99 = sbr.rel (0) target = $region61
    $region60: #{tpu_custom_call.1} parent=1 // pred_region
      %100 = dma.done [#allocation9], 512
    $region61: #{tpu_custom_call.1} parent=1 // pred_fallthru
      _
    // Predicated region
    $region62: #{tpu_custom_call.1} parent=1 // pred_check
      _
    $region63: #{tpu_custom_call.1} parent=1 // pred_check_branch
      %102 = sbr.rel (0) target = $region65
    $region64: #{tpu_custom_call.1} parent=1 // pred_region
      %103 = dma.done [#allocation9], 512
    $region65: #{tpu_custom_call.1} parent=1 // pred_fallthru
      _
    %v104 = vld [vmem:[#allocation3] sm:$0xff]
    %v105 = vld [vmem:[#allocation5] sm:$0xff]
    %v106 = vld [vmem:[#allocation7] sm:$0xff]
    %v107 = vld [vmem:[#allocation7 + $0x8] sm:$0xff]
    %v108 = vld [vmem:[%s3] sm:$0x1]
    %v110 = vlaneseq
    %v111 = vshrl.u32 %v110, 7
    %v112 = vsub.s32 0, %v111
    %v113 = vrot.slane %v108, %v112
    %vm115 = vcmask 130048
    %v117 = vsel %vm115, %v104, 0
    %119 = vmatprep.subr.mxu0 0.0
    %120 = vmatpush1.msra.mxu0 0.0
    %121 = vmatprep.subr.mxu0 0.0
    %122 = vmatpush1.msra.mxu0 0.0
    %123 = vmatprep.subr.mxu0 0.0
    %124 = vmatpush1.msra.mxu0 0.0
    %125 = vmatprep.subr.mxu0 0.0
    %126 = vmatpush1.msra.mxu0 0.0
    %127 = vmatprep.subr.mxu0 0.0
    %128 = vmatpush1.msra.mxu0 0.0
    %129 = vmatprep.subr.mxu0 0.0
    %130 = vmatpush1.msra.mxu0 0.0
    %131 = vmatprep.subr.mxu0 0.0
    %132 = vmatpush1.msra.mxu0 0.0
    %133 = vmatprep.subr.mxu0 0.0
    %134 = vmatpush1.msra.mxu0 0.0
    %135 = vmatprep.subr.mxu0 0.0
    %136 = vmatpush1.msra.mxu0 0.0
    %137 = vmatprep.subr.mxu0 0.0
    %138 = vmatpush1.msra.mxu0 0.0
    %139 = vmatprep.subr.mxu0 0.0
    %140 = vmatpush1.msra.mxu0 0.0
    %141 = vmatprep.subr.mxu0 0.0
    %142 = vmatpush1.msra.mxu0 0.0
    %143 = vmatprep.subr.mxu0 0.0
    %144 = vmatpush1.msra.mxu0 0.0
    %145 = vmatprep.subr.mxu0 0.0
    %146 = vmatpush1.msra.mxu0 0.0
    %147 = vmatprep.subr.mxu0 0.0
    %148 = vmatpush1.msra.mxu0 %v107
    %149 = vmatprep.subr.mxu0 0.0
    %150 = vmatpush1.msra.mxu0 %v106
    %151 = vmatprep.subr.mxu0 0.0
    %152 = vmatpush2.msra.mxu0 0.0
    %153 = vmatprep.subr.mxu0 0.0
    %154 = vmatpush2.msra.mxu0 0.0
    %155 = vmatprep.subr.mxu0 0.0
    %156 = vmatpush2.msra.mxu0 0.0
    %157 = vmatprep.subr.mxu0 0.0
    %158 = vmatpush2.msra.mxu0 0.0
    %159 = vmatprep.subr.mxu0 0.0
    %160 = vmatpush2.msra.mxu0 0.0
    %161 = vmatprep.subr.mxu0 0.0
    %162 = vmatpush2.msra.mxu0 0.0
    %163 = vmatprep.subr.mxu0 0.0
    %164 = vmatpush2.msra.mxu0 0.0
    %165 = vmatprep.subr.mxu0 0.0
    %166 = vmatpush2.msra.mxu0 0.0
    %167 = vmatprep.subr.mxu0 0.0
    %168 = vmatpush2.msra.mxu0 0.0
    %169 = vmatprep.subr.mxu0 0.0
    %170 = vmatpush2.msra.mxu0 0.0
    %171 = vmatprep.subr.mxu0 0.0
    %172 = vmatpush2.msra.mxu0 0.0
    %173 = vmatprep.subr.mxu0 0.0
    %174 = vmatpush2.msra.mxu0 0.0
    %175 = vmatprep.subr.mxu0 0.0
    %176 = vmatpush2.msra.mxu0 0.0
    %177 = vmatprep.subr.mxu0 0.0
    %178 = vmatpush2.msra.mxu0 0.0
    %179 = vmatprep.subr.mxu0 0.0
    %180 = vmatpush2.msra.mxu0 0.0
    %181 = vmatprep.subr.mxu0 0.0
    %182 = vmatpush2.msra.mxu0 0.0
    %183 = vmatprep.mubr.f32.mxu0 0.0
    %184 = vmatmul.mubr.f32.gmra.mxu0 %v117
    %v185 = vpop.f32.mrf.mxu0
    %v186 = vadd.f32 %v113, %v185
    %v187 = vpop.f32.mrf.mxu0
    %188 = vdwg.mxu0
    %v189 = vmax.f32 %v186, 0.0
    %v190 = vld [vmem:[#allocation8] sm:$0xff]
    %v191 = vld [vmem:[#allocation8 + $0x8] sm:$0xff]
    %v192 = vld [vmem:[#allocation8 + $0x10] sm:$0xff]
    %v193 = vld [vmem:[#allocation8 + $0x18] sm:$0xff]
    %v194 = vld [vmem:[%s5] sm:$0xff]
    %vm195 = vcmask 64512
    %v197 = vsel %vm195, %v105, 0
    %199 = vmatprep.subr.mxu0 0.0
    %200 = vmatpush1.msra.mxu0 0.0
    %201 = vmatprep.subr.mxu0 0.0
    %202 = vmatpush1.msra.mxu0 0.0
    %203 = vmatprep.subr.mxu0 0.0
    %204 = vmatpush1.msra.mxu0 0.0
    %205 = vmatprep.subr.mxu0 0.0
    %206 = vmatpush1.msra.mxu0 0.0
    %207 = vmatprep.subr.mxu0 0.0
    %208 = vmatpush1.msra.mxu0 0.0
    %209 = vmatprep.subr.mxu0 0.0
    %210 = vmatpush1.msra.mxu0 0.0
    %211 = vmatprep.subr.mxu0 0.0
    %212 = vmatpush1.msra.mxu0 0.0
    %213 = vmatprep.subr.mxu0 0.0
    %214 = vmatpush1.msra.mxu0 0.0
    %215 = vmatprep.subr.mxu0 0.0
    %216 = vmatpush1.msra.mxu0 0.0
    %217 = vmatprep.subr.mxu0 0.0
    %218 = vmatpush1.msra.mxu0 0.0
    %219 = vmatprep.subr.mxu0 0.0
    %220 = vmatpush1.msra.mxu0 0.0
    %221 = vmatprep.subr.mxu0 0.0
    %222 = vmatpush1.msra.mxu0 0.0
    %223 = vmatprep.subr.mxu0 0.0
    %224 = vmatpush1.msra.mxu0 0.0
    %225 = vmatprep.subr.mxu0 0.0
    %226 = vmatpush1.msra.mxu0 0.0
    %227 = vmatprep.subr.mxu0 0.0
    %228 = vmatpush1.msra.mxu0 0.0
    %229 = vmatprep.subr.mxu0 0.0
    %230 = vmatpush1.msra.mxu0 %v194
    %231 = vmatprep.subr.mxu0 0.0
    %232 = vmatpush2.msra.mxu0 0.0
    %233 = vmatprep.subr.mxu0 0.0
    %234 = vmatpush2.msra.mxu0 0.0
    %235 = vmatprep.subr.mxu0 0.0
    %236 = vmatpush2.msra.mxu0 0.0
    %237 = vmatprep.subr.mxu0 0.0
    %238 = vmatpush2.msra.mxu0 0.0
    %239 = vmatprep.subr.mxu0 0.0
    %240 = vmatpush2.msra.mxu0 0.0
    %241 = vmatprep.subr.mxu0 0.0
    %242 = vmatpush2.msra.mxu0 0.0
    %243 = vmatprep.subr.mxu0 0.0
    %244 = vmatpush2.msra.mxu0 0.0
    %245 = vmatprep.subr.mxu0 0.0
    %246 = vmatpush2.msra.mxu0 0.0
    %247 = vmatprep.subr.mxu0 0.0
    %248 = vmatpush2.msra.mxu0 0.0
    %249 = vmatprep.subr.mxu0 0.0
    %250 = vmatpush2.msra.mxu0 0.0
    %251 = vmatprep.subr.mxu0 0.0
    %252 = vmatpush2.msra.mxu0 0.0
    %253 = vmatprep.subr.mxu0 0.0
    %254 = vmatpush2.msra.mxu0 0.0
    %255 = vmatprep.subr.mxu0 0.0
    %256 = vmatpush2.msra.mxu0 0.0
    %257 = vmatprep.subr.mxu0 0.0
    %258 = vmatpush2.msra.mxu0 0.0
    %259 = vmatprep.subr.mxu0 0.0
    %260 = vmatpush2.msra.mxu0 0.0
    %261 = vmatprep.subr.mxu0 0.0
    %262 = vmatpush2.msra.mxu0 0.0
    %263 = vmatprep.mubr.f32.mxu0 0.0
    %264 = vmatmul.mubr.f32.gmra.mxu0 %v197
    %v265 = vpop.f32.mrf.mxu0
    %v266 = vadd.f32 0.0, %v265
    %v267 = vpop.f32.mrf.mxu0
    %268 = vdwg.mxu0
    %vm269 = vcmask 261120
    %v271 = vsel %vm269, %v189, 0
    %273 = vmatprep.subr.mxu0 0.0
    %274 = vmatpush1.msra.mxu0 0.0
    %275 = vmatprep.subr.mxu0 0.0
    %276 = vmatpush1.msra.mxu0 0.0
    %277 = vmatprep.subr.mxu0 0.0
    %278 = vmatpush1.msra.mxu0 0.0
    %279 = vmatprep.subr.mxu0 0.0
    %280 = vmatpush1.msra.mxu0 0.0
    %281 = vmatprep.subr.mxu0 0.0
    %282 = vmatpush1.msra.mxu0 0.0
    %283 = vmatprep.subr.mxu0 0.0
    %284 = vmatpush1.msra.mxu0 0.0
    %285 = vmatprep.subr.mxu0 0.0
    %286 = vmatpush1.msra.mxu0 0.0
    %287 = vmatprep.subr.mxu0 0.0
    %288 = vmatpush1.msra.mxu0 0.0
    %289 = vmatprep.subr.mxu0 0.0
    %290 = vmatpush1.msra.mxu0 0.0
    %291 = vmatprep.subr.mxu0 0.0
    %292 = vmatpush1.msra.mxu0 0.0
    %293 = vmatprep.subr.mxu0 0.0
    %294 = vmatpush1.msra.mxu0 0.0
    %295 = vmatprep.subr.mxu0 0.0
    %296 = vmatpush1.msra.mxu0 0.0
    %297 = vmatprep.subr.mxu0 0.0
    %298 = vmatpush1.msra.mxu0 %v193
    %299 = vmatprep.subr.mxu0 0.0
    %300 = vmatpush1.msra.mxu0 %v192
    %301 = vmatprep.subr.mxu0 0.0
    %302 = vmatpush1.msra.mxu0 %v191
    %303 = vmatprep.subr.mxu0 0.0
    %304 = vmatpush1.msra.mxu0 %v190
    %305 = vmatprep.subr.mxu0 0.0
    %306 = vmatpush2.msra.mxu0 0.0
    %307 = vmatprep.subr.mxu0 0.0
    %308 = vmatpush2.msra.mxu0 0.0
    %309 = vmatprep.subr.mxu0 0.0
    %310 = vmatpush2.msra.mxu0 0.0
    %311 = vmatprep.subr.mxu0 0.0
    %312 = vmatpush2.msra.mxu0 0.0
    %313 = vmatprep.subr.mxu0 0.0
    %314 = vmatpush2.msra.mxu0 0.0
    %315 = vmatprep.subr.mxu0 0.0
    %316 = vmatpush2.msra.mxu0 0.0
    %317 = vmatprep.subr.mxu0 0.0
    %318 = vmatpush2.msra.mxu0 0.0
    %319 = vmatprep.subr.mxu0 0.0
    %320 = vmatpush2.msra.mxu0 0.0
    %321 = vmatprep.subr.mxu0 0.0
    %322 = vmatpush2.msra.mxu0 0.0
    %323 = vmatprep.subr.mxu0 0.0
    %324 = vmatpush2.msra.mxu0 0.0
    %325 = vmatprep.subr.mxu0 0.0
    %326 = vmatpush2.msra.mxu0 0.0
    %327 = vmatprep.subr.mxu0 0.0
    %328 = vmatpush2.msra.mxu0 0.0
    %329 = vmatprep.subr.mxu0 0.0
    %330 = vmatpush2.msra.mxu0 0.0
    %331 = vmatprep.subr.mxu0 0.0
    %332 = vmatpush2.msra.mxu0 0.0
    %333 = vmatprep.subr.mxu0 0.0
    %334 = vmatpush2.msra.mxu0 0.0
    %335 = vmatprep.subr.mxu0 0.0
    %336 = vmatpush2.msra.mxu0 0.0
    %337 = vmatprep.mubr.f32.mxu0 0.0
    %338 = vmatmul.mubr.f32.gmra.mxu0 %v271
    %v339 = vpop.f32.mrf.mxu0
    %v340 = vadd.f32 %v266, %v339
    %v341 = vpop.f32.mrf.mxu0
    %342 = vdwg.mxu0
    %v343 = vld [vmem:[%s6] sm:$0x1]
    %v345 = vlaneseq
    %v346 = vshrl.u32 %v345, 7
    %v347 = vsub.s32 0, %v346
    %v348 = vrot.slane %v343, %v347
    %v350 = vadd.f32 %v340, %v348
    %v351 = vmax.f32 %v350, 0.0
    %v352 = vld [vmem:[#allocation10] sm:$0xff]
    %v353 = vld [vmem:[#allocation10 + $0x8] sm:$0xff]
    %v354 = vld [vmem:[#allocation10 + $0x10] sm:$0xff]
    %v355 = vld [vmem:[#allocation10 + $0x18] sm:$0xff]
    %v356 = vld [vmem:[%s8] sm:$0x1]
    %v358 = vlaneseq
    %v359 = vshrl.u32 %v358, 7
    %v360 = vsub.s32 0, %v359
    %v361 = vrot.slane %v356, %v360
    %v364 = vsel %vm269, %v351, 0
    %366 = vmatprep.subr.mxu0 0.0
    %367 = vmatpush1.msra.mxu0 0.0
    %368 = vmatprep.subr.mxu0 0.0
    %369 = vmatpush1.msra.mxu0 0.0
    %370 = vmatprep.subr.mxu0 0.0
    %371 = vmatpush1.msra.mxu0 0.0
    %372 = vmatprep.subr.mxu0 0.0
    %373 = vmatpush1.msra.mxu0 0.0
    %374 = vmatprep.subr.mxu0 0.0
    %375 = vmatpush1.msra.mxu0 0.0
    %376 = vmatprep.subr.mxu0 0.0
    %377 = vmatpush1.msra.mxu0 0.0
    %378 = vmatprep.subr.mxu0 0.0
    %379 = vmatpush1.msra.mxu0 0.0
    %380 = vmatprep.subr.mxu0 0.0
    %381 = vmatpush1.msra.mxu0 0.0
    %382 = vmatprep.subr.mxu0 0.0
    %383 = vmatpush1.msra.mxu0 0.0
    %384 = vmatprep.subr.mxu0 0.0
    %385 = vmatpush1.msra.mxu0 0.0
    %386 = vmatprep.subr.mxu0 0.0
    %387 = vmatpush1.msra.mxu0 0.0
    %388 = vmatprep.subr.mxu0 0.0
    %389 = vmatpush1.msra.mxu0 0.0
    %390 = vmatprep.subr.mxu0 0.0
    %391 = vmatpush1.msra.mxu0 %v355
    %392 = vmatprep.subr.mxu0 0.0
    %393 = vmatpush1.msra.mxu0 %v354
    %394 = vmatprep.subr.mxu0 0.0
    %395 = vmatpush1.msra.mxu0 %v353
    %396 = vmatprep.subr.mxu0 0.0
    %397 = vmatpush1.msra.mxu0 %v352
    %398 = vmatprep.subr.mxu0 0.0
    %399 = vmatpush2.msra.mxu0 0.0
    %400 = vmatprep.subr.mxu0 0.0
    %401 = vmatpush2.msra.mxu0 0.0
    %402 = vmatprep.subr.mxu0 0.0
    %403 = vmatpush2.msra.mxu0 0.0
    %404 = vmatprep.subr.mxu0 0.0
    %405 = vmatpush2.msra.mxu0 0.0
    %406 = vmatprep.subr.mxu0 0.0
    %407 = vmatpush2.msra.mxu0 0.0
    %408 = vmatprep.subr.mxu0 0.0
    %409 = vmatpush2.msra.mxu0 0.0
    %410 = vmatprep.subr.mxu0 0.0
    %411 = vmatpush2.msra.mxu0 0.0
    %412 = vmatprep.subr.mxu0 0.0
    %413 = vmatpush2.msra.mxu0 0.0
    %414 = vmatprep.subr.mxu0 0.0
    %415 = vmatpush2.msra.mxu0 0.0
    %416 = vmatprep.subr.mxu0 0.0
    %417 = vmatpush2.msra.mxu0 0.0
    %418 = vmatprep.subr.mxu0 0.0
    %419 = vmatpush2.msra.mxu0 0.0
    %420 = vmatprep.subr.mxu0 0.0
    %421 = vmatpush2.msra.mxu0 0.0
    %422 = vmatprep.subr.mxu0 0.0
    %423 = vmatpush2.msra.mxu0 0.0
    %424 = vmatprep.subr.mxu0 0.0
    %425 = vmatpush2.msra.mxu0 0.0
    %426 = vmatprep.subr.mxu0 0.0
    %427 = vmatpush2.msra.mxu0 0.0
    %428 = vmatprep.subr.mxu0 0.0
    %429 = vmatpush2.msra.mxu0 0.0
    %430 = vmatprep.mubr.f32.mxu0 0.0
    %431 = vmatmul.mubr.f32.gmra.mxu0 %v364
    %v432 = vpop.f32.mrf.mxu0
    %v433 = vadd.f32 %v361, %v432
    %v434 = vpop.f32.mrf.mxu0
    %435 = vdwg.mxu0
    %v436 = vmax.f32 %v433, 0.0
    %v437 = vld [vmem:[%s9] sm:$0x1]
    %v439 = vlaneseq
    %v440 = vshrl.u32 %v439, 7
    %v441 = vsub.s32 0, %v440
    %v442 = vrot.slane %v437, %v441
    %v444 = vmul.f32 %v436, %v442
    %v445 = vsel %vm269, %v444, 0.0
    %446 = vadd.xlane.f32.xlu0 %v445
    %v447 = vpop.xlane.xlu0 %446
    %v448 = vld [vmem:[#allocation2] sm:$0x1]
    %v450 = vlaneseq
    %v451 = vshrl.u32 %v450, 7
    %v452 = vsub.s32 0, %v451
    %v453 = vrot.slane %v448, %v452
    %v455 = vadd.f32 %v447, %v453
    %vm456 = vcmask 7168
    %457 = vst.msk [vmem:[%s11] sm:$0xff] %vm456, %v455
    // Predicated region
    $region66: #{tpu_custom_call.1} parent=1 // pred_check
      _
    $region67: #{tpu_custom_call.1} parent=1 // pred_check_branch
      %459 = sbr.rel (0) target = $region69
    $region68: #{tpu_custom_call.1} parent=1 // pred_region
      _
    $region69: #{tpu_custom_call.1} parent=1 // pred_fallthru
      _
    // Predicated region
    $region70: #{tpu_custom_call.1} parent=1 // pred_check
      _
    $region71: #{tpu_custom_call.1} parent=1 // pred_check_branch
      %461 = sbr.rel (0) target = $region73
    $region72: #{tpu_custom_call.1} parent=1 // pred_region
      _
    $region73: #{tpu_custom_call.1} parent=1 // pred_fallthru
      _
    %462 = vsyncpa [#allocation4], 1
    %463 = vsyncpa [#allocation6], 1
    %464 = vsyncpa [#allocation9], 1

</llo_original>
